<compile_context>
chip_gen: v5e
topology: v5e:2x2
jax: 0.10.0
libtpu: 0.0.40
codegen_flags: <defaults>
</compile_context>

<pallas_src>
import functools
import math

import jax
import jax.numpy as jnp
from jax.experimental import pallas as pl
from jax.experimental.pallas import tpu as pltpu


# ----------------------------------------------------------------------------
# Kernel
# ----------------------------------------------------------------------------
def mha_head_kernel(q_in_ref, k_in_ref, v_in_ref,
                    wq_ref, bq_ref, wk_ref, bk_ref, wv_ref, bv_ref,
                    wo_ref, bo_ref, o_ref, acc_ref, *, exp_dtype):
    """One grid step = (one batch block) x (one head).

    Grid = (B // batch_block, num_heads).  The head axis is last ("arbitrary")
    and reduces into `acc_ref` (the fused output projection + bias)."""
    h = pl.program_id(1)
    nh = pl.num_programs(1)

    bt, s_q, hdim = q_in_ref.shape
    _, s_kv, _ = k_in_ref.shape
    d = wq_ref.shape[2]

    # ---- per-head Q/K/V projections: flat 2-D MXU matmuls over the block ----
    # Leading-dim collapse (bt, S, H) -> (bt*S, H) is layout-free for S%8==0;
    # no per-head lane slicing or head stacking anywhere in the kernel.
    q_in = q_in_ref[...].reshape(bt * s_q, hdim).astype(jnp.bfloat16)
    k_in = k_in_ref[...].reshape(bt * s_kv, hdim).astype(jnp.bfloat16)
    v_in = v_in_ref[...].reshape(bt * s_kv, hdim).astype(jnp.bfloat16)

    # 1/sqrt(d) is already folded into wq/bq host-side.
    q = (jnp.dot(q_in, wq_ref[0], preferred_element_type=jnp.float32)
         + bq_ref[0]).reshape(bt, s_q, d)
    k = (jnp.dot(k_in, wk_ref[0], preferred_element_type=jnp.float32)
         + bk_ref[0]).reshape(bt, s_kv, d)
    v = (jnp.dot(v_in, wv_ref[0], preferred_element_type=jnp.float32)
         + bv_ref[0]).reshape(bt, s_kv, d)

    # ---- attention core (batched over the batch block, f32 accumulation) ----
    energy = jnp.einsum('bqd,bkd->bqk',
                        q.astype(jnp.bfloat16), k.astype(jnp.bfloat16),
                        preferred_element_type=jnp.float32)        # (bt,Sq,Skv)

    # TODO(synk): the mask branch (energy.masked_fill(mask == 0, -1e10)) of the
    # module is not implemented; this kernel covers the mask=None path only.

    # Numerically-stable softmax with *deferred* normalization: the row sum is
    # divided out of the (bt,Sq,d) context instead of the (bt,Sq,Skv) scores.
    m = jnp.max(energy, axis=-1, keepdims=True)
    p = jnp.exp((energy - m).astype(exp_dtype))                    # EUP slot
    l = jnp.sum(p.astype(jnp.float32), axis=-1, keepdims=True)     # f32 row sum

    ctx = jnp.einsum('bqk,bkd->bqd',
                     p.astype(jnp.bfloat16), v.astype(jnp.bfloat16),
                     preferred_element_type=jnp.float32)           # (bt,Sq,d)
    ctx = ctx * pl.reciprocal(l, approx=True)   # dropout = identity (eval mode)

    # ---- fused output projection: this head's contribution, reduced over the
    # head grid axis into the f32 accumulator (no (nH,S,H) intermediate). -----
    contrib = jnp.dot(ctx.reshape(bt * s_q, d).astype(jnp.bfloat16), wo_ref[0],
                      preferred_element_type=jnp.float32
                      ).reshape(bt, s_q, hdim)                     # (bt,Sq,H)

    @pl.when(h == 0)
    def _():
        acc_ref[...] = contrib + bo_ref[...]

    @pl.when(h > 0)
    def _():
        acc_ref[...] += contrib

    @pl.when(h == nh - 1)
    def _():
        o_ref[...] = acc_ref[...].astype(o_ref.dtype)


# ----------------------------------------------------------------------------
# Host-side parameter preparation
# ----------------------------------------------------------------------------
def prepare_headwise_params(raw_params, num_heads):
    """One-time, host-side parameter transform:
      * split the (H, H) projection weights into per-head (nH, H, d) slabs so
        heads land on a leading axis (no in-kernel lane slicing),
      * fold the 1/sqrt(d) softmax scale into the Q weights/bias,
      * reshape Wo head-major to (nH, d, H) for the fused output projection,
      * cast MXU weight operands to bf16 (biases stay f32)."""
    wq, bq, wk, bk, wv, bv, wo, bo = raw_params
    H = wq.shape[0]
    assert H % num_heads == 0
    d = H // num_heads
    inv_scale = 1.0 / math.sqrt(float(d))

    def per_head_w(w):   # (H, H) -> (nH, H, d): head h owns output cols h*d:(h+1)*d
        return jnp.transpose(w.reshape(H, num_heads, d), (1, 0, 2))

    def per_head_b(b):   # (1, H) -> (nH, 1, d)
        return jnp.transpose(b.reshape(1, num_heads, d), (1, 0, 2))

    wq3 = (per_head_w(wq) * inv_scale).astype(jnp.bfloat16)
    bq3 = per_head_b(bq) * inv_scale                                # f32
    wk3 = per_head_w(wk).astype(jnp.bfloat16)
    bk3 = per_head_b(bk)
    wv3 = per_head_w(wv).astype(jnp.bfloat16)
    bv3 = per_head_b(bv)
    wo3 = wo.reshape(num_heads, d, H).astype(jnp.bfloat16)  # head h: rows h*d:(h+1)*d
    return wq3, bq3, wk3, bk3, wv3, bv3, wo3, bo


# ----------------------------------------------------------------------------
# Per-chip knobs
# ----------------------------------------------------------------------------
def _vmem_limit_bytes():
    """~Half of physical VMEM as the scoped limit (64 MiB on v5e/v6e, 32 MiB on v7x)."""
    try:
        cap = int(pltpu.get_tpu_info().vmem_capacity_bytes)
    except Exception:
        cap = 128 * 1024 * 1024
    return int(min(max(32 * 1024 * 1024, cap // 2), 100 * 1024 * 1024))


def _use_bf16_exp():
    """bf16 EUP exists on v6e/v7x; keep f32 exp on v5e and older / unknown chips."""
    try:
        kind = jax.devices()[0].device_kind.lower()
    except Exception:
        return False
    if any(v in kind for v in ("v2", "v3", "v4", "v5")):
        return False
    return "tpu" in kind


def _pick_batch_block(B, s_q, s_kv, H, d, vmem_budget):
    """Largest divisor of B whose per-step VMEM footprint fits the budget,
    preferring >= 2 steps along the (parallel) batch axis so a 2-TC chip
    (v7x) can shard the grid."""
    s_max = max(s_q, s_kv)
    per_b = (3 * 2 * s_max * H * 4      # double-buffered q/k/v input blocks
             + 3 * s_q * H * 4          # output block (x2) + f32 accumulator
             + 3 * s_max * d * 4        # per-head Q/K/V projections (f32)
             + 4 * s_q * s_kv * 4)      # energy / exp temporaries
    cap = max(1, int((vmem_budget * 0.6) // per_b))
    cap = min(cap, B)
    if B >= 2:
        cap = min(cap, max(1, B // 2))
    return next(bb for bb in range(cap, 0, -1) if B % bb == 0)


# ----------------------------------------------------------------------------
# Wrapper
# ----------------------------------------------------------------------------
def self_attention_pallas(query, key, value, headwise_params, num_heads, *,
                          batch_block=None, exp_in_bf16=None):
    """Forward pass of SelfAttentionLayer (mask=None, eval mode)."""
    assert key.shape == value.shape
    B, S_q, H = query.shape
    Bk, S_kv, Hk = key.shape
    assert B == Bk and H == Hk and H % num_heads == 0
    d = H // num_heads
    wq3, bq3, wk3, bk3, wv3, bv3, wo3, bo = headwise_params

    vmem_limit = _vmem_limit_bytes()
    if batch_block is None:
        batch_block = _pick_batch_block(B, S_q, S_kv, H, d, vmem_limit)
    assert B % batch_block == 0
    if exp_in_bf16 is None:
        exp_in_bf16 = _use_bf16_exp()
    exp_dtype = jnp.bfloat16 if exp_in_bf16 else jnp.float32

    kernel = functools.partial(mha_head_kernel, exp_dtype=exp_dtype)

    q_spec = pl.BlockSpec((batch_block, S_q, H), lambda bi, h: (bi, 0, 0))
    kv_spec = pl.BlockSpec((batch_block, S_kv, H), lambda bi, h: (bi, 0, 0))
    w_spec = pl.BlockSpec((1, H, d), lambda bi, h: (h, 0, 0))
    b_spec = pl.BlockSpec((1, 1, d), lambda bi, h: (h, 0, 0))
    wo_spec = pl.BlockSpec((1, d, H), lambda bi, h: (h, 0, 0))
    bo_spec = pl.BlockSpec((1, H), lambda bi, h: (0, 0))

    # TODO(synk): for large S a flash-style (query-block x KV-block) tiling with
    # online-softmax m/l/acc scratch is needed so the (batch_block, S, S) score
    # tensor never materializes; the full-S scores here are fine for moderate S.
    return pl.pallas_call(
        kernel,
        out_shape=jax.ShapeDtypeStruct((B, S_q, H), query.dtype),
        grid_spec=pltpu.PrefetchScalarGridSpec(
            num_scalar_prefetch=0,
            grid=(B // batch_block, num_heads),     # heads last: reduction axis
            in_specs=[q_spec, kv_spec, kv_spec,
                      w_spec, b_spec, w_spec, b_spec, w_spec, b_spec,
                      wo_spec, bo_spec],
            out_specs=q_spec,
            scratch_shapes=[pltpu.VMEM((batch_block, S_q, H), jnp.float32)],
        ),
        compiler_params=pltpu.CompilerParams(
            dimension_semantics=("parallel", "arbitrary"),
            vmem_limit_bytes=vmem_limit,
        ),
    )(query, key, value, wq3, bq3, wk3, bk3, wv3, bv3, wo3, bo)


# ----------------------------------------------------------------------------
# Pure-JAX reference + parameter init
# ----------------------------------------------------------------------------
def self_attention_ref(q, k, v, raw_params, num_heads):
    """Pure-JAX f32 reference mirroring the PyTorch forward (mask=None, eval)."""
    wq, bq, wk, bk, wv, bv, wo, bo = raw_params
    B, S_q, H = q.shape
    S_kv = k.shape[1]
    d = H // num_heads
    scale = math.sqrt(float(d))

    Q = q @ wq + bq
    K = k @ wk + bk
    V = v @ wv + bv

    def split(x, S):  # (B,S,H) -> (B,nH,S,d)
        return x.reshape(B, S, num_heads, d).transpose(0, 2, 1, 3)

    Qh, Kh, Vh = split(Q, S_q), split(K, S_kv), split(V, S_kv)
    energy = jnp.einsum('bhqd,bhkd->bhqk', Qh, Kh) / scale
    attn = jax.nn.softmax(energy, axis=-1)
    out = jnp.einsum('bhqk,bhkd->bhqd', attn, Vh)
    out = out.transpose(0, 2, 1, 3).reshape(B, S_q, H)
    return out @ wo + bo


def init_params(key, hidden_dim):
    """Weights stored pre-transposed as (in_features, out_features): y = x @ W + b."""
    ks = jax.random.split(key, 8)
    std = 0.02
    wq = jax.random.normal(ks[0], (hidden_dim, hidden_dim), jnp.float32) * std
    bq = jax.random.normal(ks[1], (1, hidden_dim), jnp.float32) * std
    wk = jax.random.normal(ks[2], (hidden_dim, hidden_dim), jnp.float32) * std
    bk = jax.random.normal(ks[3], (1, hidden_dim), jnp.float32) * std
    wv = jax.random.normal(ks[4], (hidden_dim, hidden_dim), jnp.float32) * std
    bv = jax.random.normal(ks[5], (1, hidden_dim), jnp.float32) * std
    wo = jax.random.normal(ks[6], (hidden_dim, hidden_dim), jnp.float32) * std
    bo = jax.random.normal(ks[7], (1, hidden_dim), jnp.float32) * std
    return (wq, bq, wk, bk, wv, bv, wo, bo)


if __name__ == "__main__":
    batch, seq_len, hidden_dim, num_heads = 2, 8, 32, 4

    key = jax.random.PRNGKey(0)
    kx, kp, kc = jax.random.split(key, 3)
    x = jax.random.normal(kx, (batch, seq_len, hidden_dim), jnp.float32)
    raw_params = init_params(kp, hidden_dim)
    headwise_params = prepare_headwise_params(raw_params, num_heads)

    # Self-attention path (query is key is value), as used by the encoder.
    out = self_attention_pallas(x, x, x, headwise_params, num_heads)
    out = jax.block_until_ready(out)
    ref = self_attention_ref(x, x, x, raw_params, num_heads)
    assert out.shape == (batch, seq_len, hidden_dim)
    # bf16 MXU operands + approx reciprocal => bf16-level tolerance vs f32 ref.
    assert jnp.allclose(out, ref, atol=1e-2, rtol=1e-2), "self-attention mismatch"

    # Cross-attention path (distinct key/value source) also supported.
    kv = jax.random.normal(kc, (batch, seq_len, hidden_dim), jnp.float32)
    out_x = jax.block_until_ready(
        self_attention_pallas(x, kv, kv, headwise_params, num_heads))
    ref_x = self_attention_ref(x, kv, kv, raw_params, num_heads)
    assert jnp.allclose(out_x, ref_x, atol=1e-2, rtol=1e-2), "cross-attention mismatch"

    print("KERNEL_OK")
</pallas_src>

<mosaic_0001>
module attributes {stable_mosaic.version = 11 : i64} {
  func.func @mha_head_kernel(%arg0: i32, %arg1: i32, %arg2: memref<1x8x32xf32, #tpu.memory_space<vmem>>, %arg3: memref<1x8x32xf32, #tpu.memory_space<vmem>>, %arg4: memref<1x8x32xf32, #tpu.memory_space<vmem>>, %arg5: memref<1x32x8xbf16, #tpu.memory_space<vmem>>, %arg6: memref<1x1x8xf32, #tpu.memory_space<vmem>>, %arg7: memref<1x32x8xbf16, #tpu.memory_space<vmem>>, %arg8: memref<1x1x8xf32, #tpu.memory_space<vmem>>, %arg9: memref<1x32x8xbf16, #tpu.memory_space<vmem>>, %arg10: memref<1x1x8xf32, #tpu.memory_space<vmem>>, %arg11: memref<1x8x32xbf16, #tpu.memory_space<vmem>>, %arg12: memref<1x32xf32, #tpu.memory_space<vmem>>, %arg13: memref<1x8x32xf32, #tpu.memory_space<vmem>>, %arg14: memref<1x8x32xf32, #tpu.memory_space<vmem>>) attributes {dimension_semantics = [#tpu.dimension_semantics<parallel>, #tpu.dimension_semantics<arbitrary>], iteration_bounds = array<i64: 2, 4>, scalar_prefetch = 0 : i64, scratch_operands = 1 : i64, tpu.core_type = #tpu.core_type<tc>, window_params = [{transform_indices = @transform_0, window_bounds = array<i64: 1, 8, 32>}, {transform_indices = @transform_1, window_bounds = array<i64: 1, 8, 32>}, {transform_indices = @transform_2, window_bounds = array<i64: 1, 8, 32>}, {transform_indices = @transform_3, window_bounds = array<i64: 1, 32, 8>}, {transform_indices = @transform_4, window_bounds = array<i64: 1, 1, 8>}, {transform_indices = @transform_5, window_bounds = array<i64: 1, 32, 8>}, {transform_indices = @transform_6, window_bounds = array<i64: 1, 1, 8>}, {transform_indices = @transform_7, window_bounds = array<i64: 1, 32, 8>}, {transform_indices = @transform_8, window_bounds = array<i64: 1, 1, 8>}, {transform_indices = @transform_9, window_bounds = array<i64: 1, 8, 32>}, {pipeline_mode = #tpu.pipeline_mode<synchronous>, transform_indices = @transform_10, window_bounds = array<i64: 1, 32>}, {transform_indices = @transform_11, window_bounds = array<i64: 1, 8, 32>}]} {
    %c0 = arith.constant 0 : index
    %c0_0 = arith.constant 0 : index
    %c0_1 = arith.constant 0 : index
    %0 = vector.load %arg2[%c0, %c0_0, %c0_1] : memref<1x8x32xf32, #tpu.memory_space<vmem>>, vector<1x8x32xf32>
    %1 = vector.shape_cast %0 : vector<1x8x32xf32> to vector<8x32xf32>
    %2 = arith.truncf %1 : vector<8x32xf32> to vector<8x32xbf16>
    %c0_2 = arith.constant 0 : index
    %c0_3 = arith.constant 0 : index
    %c0_4 = arith.constant 0 : index
    %3 = vector.load %arg3[%c0_2, %c0_3, %c0_4] : memref<1x8x32xf32, #tpu.memory_space<vmem>>, vector<1x8x32xf32>
    %4 = vector.shape_cast %3 : vector<1x8x32xf32> to vector<8x32xf32>
    %5 = arith.truncf %4 : vector<8x32xf32> to vector<8x32xbf16>
    %c0_5 = arith.constant 0 : index
    %c0_6 = arith.constant 0 : index
    %c0_7 = arith.constant 0 : index
    %6 = vector.load %arg4[%c0_5, %c0_6, %c0_7] : memref<1x8x32xf32, #tpu.memory_space<vmem>>, vector<1x8x32xf32>
    %7 = vector.shape_cast %6 : vector<1x8x32xf32> to vector<8x32xf32>
    %8 = arith.truncf %7 : vector<8x32xf32> to vector<8x32xbf16>
    %c0_8 = arith.constant 0 : index
    %c0_9 = arith.constant 0 : index
    %c0_10 = arith.constant 0 : index
    %9 = vector.load %arg5[%c0_8, %c0_9, %c0_10] : memref<1x32x8xbf16, #tpu.memory_space<vmem>>, vector<1x32x8xbf16>
    %10 = vector.shape_cast %9 : vector<1x32x8xbf16> to vector<32x8xbf16>
    %cst = arith.constant dense<0.000000e+00> : vector<8x8xf32>
    %11 = tpu.matmul %2, %10, %cst {dimension_numbers = #tpu.dot_dimension_numbers<[1], [0], [0], [1], [0, 0, 1, 1], [], []>} : vector<8x32xbf16>, vector<32x8xbf16>, vector<8x8xf32> -> vector<8x8xf32>
    %c0_11 = arith.constant 0 : index
    %c0_12 = arith.constant 0 : index
    %c0_13 = arith.constant 0 : index
    %12 = vector.load %arg6[%c0_11, %c0_12, %c0_13] : memref<1x1x8xf32, #tpu.memory_space<vmem>>, vector<1x1x8xf32>
    %13 = vector.shape_cast %12 : vector<1x1x8xf32> to vector<1x8xf32>
    %14 = vector.broadcast %13 : vector<1x8xf32> to vector<8x8xf32>
    %15 = arith.addf %11, %14 : vector<8x8xf32>
    %16 = vector.shape_cast %15 : vector<8x8xf32> to vector<1x8x8xf32>
    %c0_14 = arith.constant 0 : index
    %c0_15 = arith.constant 0 : index
    %c0_16 = arith.constant 0 : index
    %17 = vector.load %arg7[%c0_14, %c0_15, %c0_16] : memref<1x32x8xbf16, #tpu.memory_space<vmem>>, vector<1x32x8xbf16>
    %18 = vector.shape_cast %17 : vector<1x32x8xbf16> to vector<32x8xbf16>
    %cst_17 = arith.constant dense<0.000000e+00> : vector<8x8xf32>
    %19 = tpu.matmul %5, %18, %cst_17 {dimension_numbers = #tpu.dot_dimension_numbers<[1], [0], [0], [1], [0, 0, 1, 1], [], []>} : vector<8x32xbf16>, vector<32x8xbf16>, vector<8x8xf32> -> vector<8x8xf32>
    %c0_18 = arith.constant 0 : index
    %c0_19 = arith.constant 0 : index
    %c0_20 = arith.constant 0 : index
    %20 = vector.load %arg8[%c0_18, %c0_19, %c0_20] : memref<1x1x8xf32, #tpu.memory_space<vmem>>, vector<1x1x8xf32>
    %21 = vector.shape_cast %20 : vector<1x1x8xf32> to vector<1x8xf32>
    %22 = vector.broadcast %21 : vector<1x8xf32> to vector<8x8xf32>
    %23 = arith.addf %19, %22 : vector<8x8xf32>
    %24 = vector.shape_cast %23 : vector<8x8xf32> to vector<1x8x8xf32>
    %c0_21 = arith.constant 0 : index
    %c0_22 = arith.constant 0 : index
    %c0_23 = arith.constant 0 : index
    %25 = vector.load %arg9[%c0_21, %c0_22, %c0_23] : memref<1x32x8xbf16, #tpu.memory_space<vmem>>, vector<1x32x8xbf16>
    %26 = vector.shape_cast %25 : vector<1x32x8xbf16> to vector<32x8xbf16>
    %cst_24 = arith.constant dense<0.000000e+00> : vector<8x8xf32>
    %27 = tpu.matmul %8, %26, %cst_24 {dimension_numbers = #tpu.dot_dimension_numbers<[1], [0], [0], [1], [0, 0, 1, 1], [], []>} : vector<8x32xbf16>, vector<32x8xbf16>, vector<8x8xf32> -> vector<8x8xf32>
    %c0_25 = arith.constant 0 : index
    %c0_26 = arith.constant 0 : index
    %c0_27 = arith.constant 0 : index
    %28 = vector.load %arg10[%c0_25, %c0_26, %c0_27] : memref<1x1x8xf32, #tpu.memory_space<vmem>>, vector<1x1x8xf32>
    %29 = vector.shape_cast %28 : vector<1x1x8xf32> to vector<1x8xf32>
    %30 = vector.broadcast %29 : vector<1x8xf32> to vector<8x8xf32>
    %31 = arith.addf %27, %30 : vector<8x8xf32>
    %32 = vector.shape_cast %31 : vector<8x8xf32> to vector<1x8x8xf32>
    %33 = arith.truncf %16 : vector<1x8x8xf32> to vector<1x8x8xbf16>
    %34 = arith.truncf %24 : vector<1x8x8xf32> to vector<1x8x8xbf16>
    "tpu.trace_start"() <{level = 10 : i32, message = "bqd,bkd->bqk"}> : () -> ()
    %cst_28 = arith.constant dense<0.000000e+00> : vector<1x8x8xf32>
    %35 = tpu.matmul %33, %34, %cst_28 {dimension_numbers = #tpu.dot_dimension_numbers<[2], [2], [1], [1], [0, 0, 0, 1, 1, 1], [0], [0]>} : vector<1x8x8xbf16>, vector<1x8x8xbf16>, vector<1x8x8xf32> -> vector<1x8x8xf32>
    "tpu.trace_stop"() : () -> ()
    %cst_29 = arith.constant dense<0xFF800000> : vector<1x8xf32>
    %36 = vector.multi_reduction <maximumf>, %35, %cst_29 [2] : vector<1x8x8xf32> to vector<1x8xf32>
    %37 = vector.shape_cast %36 : vector<1x8xf32> to vector<1x8x1xf32>
    %38 = vector.broadcast %37 : vector<1x8x1xf32> to vector<1x8x8xf32>
    %39 = arith.subf %35, %38 : vector<1x8x8xf32>
    %40 = math.exp %39 : vector<1x8x8xf32>
    %cst_30 = arith.constant dense<0.000000e+00> : vector<1x8xf32>
    %41 = vector.multi_reduction <add>, %40, %cst_30 [2] : vector<1x8x8xf32> to vector<1x8xf32>
    %42 = vector.shape_cast %41 : vector<1x8xf32> to vector<1x8x1xf32>
    %43 = arith.truncf %40 : vector<1x8x8xf32> to vector<1x8x8xbf16>
    %44 = arith.truncf %32 : vector<1x8x8xf32> to vector<1x8x8xbf16>
    "tpu.trace_start"() <{level = 10 : i32, message = "bqk,bkd->bqd"}> : () -> ()
    %cst_31 = arith.constant dense<0.000000e+00> : vector<1x8x8xf32>
    %45 = tpu.matmul %43, %44, %cst_31 {dimension_numbers = #tpu.dot_dimension_numbers<[2], [1], [1], [2], [0, 0, 0, 1, 1, 2], [0], [0]>} : vector<1x8x8xbf16>, vector<1x8x8xbf16>, vector<1x8x8xf32> -> vector<1x8x8xf32>
    "tpu.trace_stop"() : () -> ()
    %46 = tpu.reciprocal %42 {approx = true} : vector<1x8x1xf32> -> vector<1x8x1xf32>
    %47 = vector.broadcast %46 : vector<1x8x1xf32> to vector<1x8x8xf32>
    %48 = arith.mulf %45, %47 : vector<1x8x8xf32>
    %49 = vector.shape_cast %48 : vector<1x8x8xf32> to vector<8x8xf32>
    %50 = arith.truncf %49 : vector<8x8xf32> to vector<8x8xbf16>
    %c0_32 = arith.constant 0 : index
    %c0_33 = arith.constant 0 : index
    %c0_34 = arith.constant 0 : index
    %51 = vector.load %arg11[%c0_32, %c0_33, %c0_34] : memref<1x8x32xbf16, #tpu.memory_space<vmem>>, vector<1x8x32xbf16>
    %52 = vector.shape_cast %51 : vector<1x8x32xbf16> to vector<8x32xbf16>
    %cst_35 = arith.constant dense<0.000000e+00> : vector<8x32xf32>
    %53 = tpu.matmul %50, %52, %cst_35 {dimension_numbers = #tpu.dot_dimension_numbers<[1], [0], [0], [1], [0, 0, 1, 1], [], []>} : vector<8x8xbf16>, vector<8x32xbf16>, vector<8x32xf32> -> vector<8x32xf32>
    %54 = vector.shape_cast %53 : vector<8x32xf32> to vector<1x8x32xf32>
    %c0_i32 = arith.constant 0 : i32
    %55 = arith.cmpi eq, %arg1, %c0_i32 : i32
    %56 = arith.extui %55 : i1 to i32
    %c0_i32_36 = arith.constant 0 : i32
    %57 = arith.cmpi ne, %56, %c0_i32_36 : i32
    scf.if %57 {
      %c0_40 = arith.constant 0 : index
      %c0_41 = arith.constant 0 : index
      %64 = vector.load %arg12[%c0_40, %c0_41] : memref<1x32xf32, #tpu.memory_space<vmem>>, vector<1x32xf32>
      %65 = vector.shape_cast %64 : vector<1x32xf32> to vector<1x1x32xf32>
      %66 = vector.broadcast %65 : vector<1x1x32xf32> to vector<1x8x32xf32>
      %67 = arith.addf %54, %66 : vector<1x8x32xf32>
      %c0_42 = arith.constant 0 : index
      %c0_43 = arith.constant 0 : index
      %c0_44 = arith.constant 0 : index
      %68 = vector.load %arg14[%c0_42, %c0_43, %c0_44] : memref<1x8x32xf32, #tpu.memory_space<vmem>>, vector<1x8x32xf32>
      tpu.vector_store %arg14[%c0_42, %c0_43, %c0_44], %67 {strides = array<i32>} : memref<1x8x32xf32, #tpu.memory_space<vmem>>, vector<1x8x32xf32>,
    } else {
    }
    %c0_i32_37 = arith.constant 0 : i32
    %58 = arith.cmpi sgt, %arg1, %c0_i32_37 : i32
    %59 = arith.extui %58 : i1 to i32
    %c0_i32_38 = arith.constant 0 : i32
    %60 = arith.cmpi ne, %59, %c0_i32_38 : i32
    scf.if %60 {
      %c0_40 = arith.constant 0 : index
      %c0_41 = arith.constant 0 : index
      %c0_42 = arith.constant 0 : index
      %64 = vector.load %arg14[%c0_40, %c0_41, %c0_42] : memref<1x8x32xf32, #tpu.memory_space<vmem>>, vector<1x8x32xf32>
      %65 = arith.addf %64, %54 : vector<1x8x32xf32>
      %c0_43 = arith.constant 0 : index
      %c0_44 = arith.constant 0 : index
      %c0_45 = arith.constant 0 : index
      %66 = vector.load %arg14[%c0_43, %c0_44, %c0_45] : memref<1x8x32xf32, #tpu.memory_space<vmem>>, vector<1x8x32xf32>
      tpu.vector_store %arg14[%c0_43, %c0_44, %c0_45], %65 {strides = array<i32>} : memref<1x8x32xf32, #tpu.memory_space<vmem>>, vector<1x8x32xf32>,
    } else {
    }
    %c3_i32 = arith.constant 3 : i32
    %61 = arith.cmpi eq, %arg1, %c3_i32 : i32
    %62 = arith.extui %61 : i1 to i32
    %c0_i32_39 = arith.constant 0 : i32
    %63 = arith.cmpi ne, %62, %c0_i32_39 : i32
    scf.if %63 {
      %c0_40 = arith.constant 0 : index
      %c0_41 = arith.constant 0 : index
      %c0_42 = arith.constant 0 : index
      %64 = vector.load %arg14[%c0_40, %c0_41, %c0_42] : memref<1x8x32xf32, #tpu.memory_space<vmem>>, vector<1x8x32xf32>
      %c0_43 = arith.constant 0 : index
      %c0_44 = arith.constant 0 : index
      %c0_45 = arith.constant 0 : index
      %65 = vector.load %arg13[%c0_43, %c0_44, %c0_45] : memref<1x8x32xf32, #tpu.memory_space<vmem>>, vector<1x8x32xf32>
      tpu.vector_store %arg13[%c0_43, %c0_44, %c0_45], %64 {strides = array<i32>} : memref<1x8x32xf32, #tpu.memory_space<vmem>>, vector<1x8x32xf32>,
    } else {
    }
    return
  }
  func.func @transform_0(%arg0: i32, %arg1: i32) -> (i32, i32, i32) {
    %c0_i32 = arith.constant 0 : i32
    %c0_i32_0 = arith.constant 0 : i32
    %c0_i32_1 = arith.constant 0 : i32
    return %arg0, %c0_i32, %c0_i32_0 : i32, i32, i32
  }
  func.func @transform_1(%arg0: i32, %arg1: i32) -> (i32, i32, i32) {
    %c0_i32 = arith.constant 0 : i32
    %c0_i32_0 = arith.constant 0 : i32
    %c0_i32_1 = arith.constant 0 : i32
    return %arg0, %c0_i32, %c0_i32_0 : i32, i32, i32
  }
  func.func @transform_2(%arg0: i32, %arg1: i32) -> (i32, i32, i32) {
    %c0_i32 = arith.constant 0 : i32
    %c0_i32_0 = arith.constant 0 : i32
    %c0_i32_1 = arith.constant 0 : i32
    return %arg0, %c0_i32, %c0_i32_0 : i32, i32, i32
  }
  func.func @transform_3(%arg0: i32, %arg1: i32) -> (i32, i32, i32) {
    %c0_i32 = arith.constant 0 : i32
    %c0_i32_0 = arith.constant 0 : i32
    %c0_i32_1 = arith.constant 0 : i32
    return %arg1, %c0_i32, %c0_i32_0 : i32, i32, i32
  }
  func.func @transform_4(%arg0: i32, %arg1: i32) -> (i32, i32, i32) {
    %c0_i32 = arith.constant 0 : i32
    %c0_i32_0 = arith.constant 0 : i32
    %c0_i32_1 = arith.constant 0 : i32
    return %arg1, %c0_i32, %c0_i32_0 : i32, i32, i32
  }
  func.func @transform_5(%arg0: i32, %arg1: i32) -> (i32, i32, i32) {
    %c0_i32 = arith.constant 0 : i32
    %c0_i32_0 = arith.constant 0 : i32
    %c0_i32_1 = arith.constant 0 : i32
    return %arg1, %c0_i32, %c0_i32_0 : i32, i32, i32
  }
  func.func @transform_6(%arg0: i32, %arg1: i32) -> (i32, i32, i32) {
    %c0_i32 = arith.constant 0 : i32
    %c0_i32_0 = arith.constant 0 : i32
    %c0_i32_1 = arith.constant 0 : i32
    return %arg1, %c0_i32, %c0_i32_0 : i32, i32, i32
  }
  func.func @transform_7(%arg0: i32, %arg1: i32) -> (i32, i32, i32) {
    %c0_i32 = arith.constant 0 : i32
    %c0_i32_0 = arith.constant 0 : i32
    %c0_i32_1 = arith.constant 0 : i32
    return %arg1, %c0_i32, %c0_i32_0 : i32, i32, i32
  }
  func.func @transform_8(%arg0: i32, %arg1: i32) -> (i32, i32, i32) {
    %c0_i32 = arith.constant 0 : i32
    %c0_i32_0 = arith.constant 0 : i32
    %c0_i32_1 = arith.constant 0 : i32
    return %arg1, %c0_i32, %c0_i32_0 : i32, i32, i32
  }
  func.func @transform_9(%arg0: i32, %arg1: i32) -> (i32, i32, i32) {
    %c0_i32 = arith.constant 0 : i32
    %c0_i32_0 = arith.constant 0 : i32
    %c0_i32_1 = arith.constant 0 : i32
    return %arg1, %c0_i32, %c0_i32_0 : i32, i32, i32
  }
  func.func @transform_10(%arg0: i32, %arg1: i32) -> (i32, i32) {
    %c0_i32 = arith.constant 0 : i32
    %c0_i32_0 = arith.constant 0 : i32
    %c0_i32_1 = arith.constant 0 : i32
    return %c0_i32, %c0_i32_0 : i32, i32
  }
  func.func @transform_11(%arg0: i32, %arg1: i32) -> (i32, i32, i32) {
    %c0_i32 = arith.constant 0 : i32
    %c0_i32_0 = arith.constant 0 : i32
    %c0_i32_1 = arith.constant 0 : i32
    return %arg0, %c0_i32, %c0_i32_0 : i32, i32, i32
  }
}

</mosaic_0001>

<llo_original>
// kernel: tpu_custom_call.1
$region0: #{tpu_custom_call.1}
  #allocation0 [shape = 'u32[]', space=smem, size = 0x4, offset = 0x4, fixed_abs, tag = 'smem constant byte address 0x4 - core index']
  #allocation1 [shape = 'u32[72,128]{1,0:T(1,128)}', space=vmem, size = 0x9000, scoped, tag = 'internal scratch']
  #allocation2 [shape = 'f32[1,8,32]{2,1,0:T(8,128)}', space=vmem, size = 0x1000, scoped, tag = 'scratch operand']
  %s0 = inlined_call_operand.vmem [shape: f32[2,8,32], index: 0, kind: input, shape index: {}]
  %s1 = inlined_call_operand.vmem [shape: f32[2,8,32], index: 1, kind: input, shape index: {}]
  %s2 = inlined_call_operand.vmem [shape: f32[2,8,32], index: 2, kind: input, shape index: {}]
  %s3 = inlined_call_operand.vmem [shape: bf16[4,32,8], index: 3, kind: input, shape index: {}]
  %s4 = inlined_call_operand.vmem [shape: f32[4,1,8], index: 4, kind: input, shape index: {}]
  %s5 = inlined_call_operand.vmem [shape: bf16[4,32,8], index: 5, kind: input, shape index: {}]
  %s6 = inlined_call_operand.vmem [shape: f32[4,1,8], index: 6, kind: input, shape index: {}]
  %s7 = inlined_call_operand.vmem [shape: bf16[4,32,8], index: 7, kind: input, shape index: {}]
  %s8 = inlined_call_operand.vmem [shape: f32[4,1,8], index: 8, kind: input, shape index: {}]
  %s9 = inlined_call_operand.vmem [shape: bf16[4,8,32], index: 9, kind: input, shape index: {}]
  %s10 = inlined_call_operand.vmem [shape: f32[1,32], index: 10, kind: input, shape index: {}]
  %s11 = inlined_call_operand.hbm [shape: f32[2,8,32], index: 11, kind: output, shape index: {}]
  %s12 = sld [smem:[#allocation0]]
  $region89: #{tpu_custom_call.1} parent=0
    _
  %s14 = ssub.s32 1, %s12
  %s15 = scalar_select 0, %s14, %s12
  $region1: #{tpu_custom_call.1} parent=0
    #allocation3 [shape = 'u8[8192]{0}', space=vmem, size = 0x2000, scoped, tag = 'output window, operand 0']
    #allocation4 [shape = 's32[2]{0}', space=sflag, size = 0x8, scoped, tag = 'scoped memory for tpu_custom_call.1']
    %16 = vsyncpa [#allocation4], 0
    %s17 = scalar_lea.sflag [#allocation4], 1
    %18 = vsyncpa %s17, 0
    loop: start=0, step=1, limit=10
    $region2: #{tpu_custom_call.1} parent=1 // loop_pre_header
      _
    $region3: #{tpu_custom_call.1} parent=1 // loop_header
      %s20 = sphi 0, %s24
      %p21 = scmp.ge.s32.totalorder %s20, 10
      %s27 = sphi 0, %s39
      %s28 = sphi 0, %s35
      %s29 = sphi 0, %s27
      %s30 = sphi 0, %s28
      %s31 = sphi 0, %s29
      %s32 = sphi 0, %s30
      %s42 = sphi 0, %s44
      %s45 = sphi 0, %s42
      %s46 = sphi 0, %s45
      %s62 = sphi 0, %s46
      %s68 = sphi 0, %s70
      %s71 = sphi 0, %s68
      %s72 = sphi 0, %s71
      %s88 = sphi 0, %s72
      %s94 = sphi 0, %s96
      %s97 = sphi 0, %s94
      %s98 = sphi 0, %s97
      %s114 = sphi 0, %s98
      %s120 = sphi 0, %s122
      %s123 = sphi 0, %s120
      %s124 = sphi 0, %s123
      %s140 = sphi 0, %s124
      %s146 = sphi 0, %s148
      %s149 = sphi 0, %s146
      %s150 = sphi 0, %s149
      %s166 = sphi 0, %s150
      %s172 = sphi 0, %s174
      %s175 = sphi 0, %s172
      %s176 = sphi 0, %s175
      %s192 = sphi 0, %s176
      %s198 = sphi 0, %s200
      %s201 = sphi 0, %s198
      %s202 = sphi 0, %s201
      %s218 = sphi 0, %s202
      %s224 = sphi 0, %s226
      %s227 = sphi 0, %s224
      %s228 = sphi 0, %s227
      %s244 = sphi 0, %s228
      %s250 = sphi 0, %s252
      %s253 = sphi 0, %s250
      %s254 = sphi 0, %s253
      %s270 = sphi 0, %s254
      %s276 = sphi 0, %s278
      %s279 = sphi 0, %s276
      %s280 = sphi 0, %s279
      %s296 = sphi 0, %s280
      %s300 = sphi 0, %s300
      %s302 = sphi 0, %s300
      %s303 = sphi 0, %s302
      %s317 = sphi 0, %s303
      %s323 = sphi 0, %s325
      %s326 = sphi 0, %s323
      %s327 = sphi 0, %s326
      %s343 = sphi 0, %s327
    $region4: #{tpu_custom_call.1} parent=1 // loop_header_branch
      %23 = sbr.rel (%p21) target = $region8
    $region5: #{tpu_custom_call.1} parent=1 // loop_body
      %s25 = ssub.s32 %s20, 1
      %s26 = ssub.s32 %s20, 2
      %s33 = sadd.s32 1, %s28
      %p34 = scmp.ge.s32.totalorder %s33, 4
      %s35 = scalar_select %p34, 0, %s33
      %s36 = sadd.s32 1, %s27
      %s37 = scalar_select %p34, %s36, %s27
      %p38 = scmp.ge.s32.totalorder %s37, 2
      %s39 = scalar_select %p38, 0, %s37
      %s40 = ssub.s32 %s27, %s39
      %p41 = scmp.eq.s32.totalorder %s40, 0
      %s43 = sadd.s32 %s42, 1
      %s44 = scalar_select %p41, %s42, %s43
      %p47 = pneg %p41
      %p48 = scmp.eq.s32.totalorder %s20, 7
      %p49 = por %p47, %p48
      %p50 = scmp.ne.s32.totalorder %s42, %s45
      %p51 = scmp.eq.s32.totalorder %s20, 0
      %p52 = por %p50, %p51
      %p53 = scmp.ne.s32.totalorder %s42, %s45
      %p54 = scmp.eq.s32.totalorder %s25, 7
      %p55 = por %p53, %p54
      %p56 = scmp.ne.s32.totalorder %s45, %s46
      %p57 = scmp.eq.s32.totalorder %s25, 0
      %p58 = por %p56, %p57
      %p59 = scmp.ne.s32.totalorder %s45, %s46
      %p60 = scmp.eq.s32.totalorder %s26, 7
      %p61 = por %p59, %p60
      %p63 = scmp.ne.s32.totalorder %s46, %s62
      %p64 = scmp.eq.s32.totalorder %s26, 0
      %p65 = por %p63, %p64
      %s66 = ssub.s32 %s27, %s39
      %p67 = scmp.eq.s32.totalorder %s66, 0
      %s69 = sadd.s32 %s68, 1
      %s70 = scalar_select %p67, %s68, %s69
      %p73 = pneg %p67
      %p74 = scmp.eq.s32.totalorder %s20, 7
      %p75 = por %p73, %p74
      %p76 = scmp.ne.s32.totalorder %s68, %s71
      %p77 = scmp.eq.s32.totalorder %s20, 0
      %p78 = por %p76, %p77
      %p79 = scmp.ne.s32.totalorder %s68, %s71
      %p80 = scmp.eq.s32.totalorder %s25, 7
      %p81 = por %p79, %p80
      %p82 = scmp.ne.s32.totalorder %s71, %s72
      %p83 = scmp.eq.s32.totalorder %s25, 0
      %p84 = por %p82, %p83
      %p85 = scmp.ne.s32.totalorder %s71, %s72
      %p86 = scmp.eq.s32.totalorder %s26, 7
      %p87 = por %p85, %p86
      %p89 = scmp.ne.s32.totalorder %s72, %s88
      %p90 = scmp.eq.s32.totalorder %s26, 0
      %p91 = por %p89, %p90
      %s92 = ssub.s32 %s27, %s39
      %p93 = scmp.eq.s32.totalorder %s92, 0
      %s95 = sadd.s32 %s94, 1
      %s96 = scalar_select %p93, %s94, %s95
      %p99 = pneg %p93
      %p100 = scmp.eq.s32.totalorder %s20, 7
      %p101 = por %p99, %p100
      %p102 = scmp.ne.s32.totalorder %s94, %s97
      %p103 = scmp.eq.s32.totalorder %s20, 0
      %p104 = por %p102, %p103
      %p105 = scmp.ne.s32.totalorder %s94, %s97
      %p106 = scmp.eq.s32.totalorder %s25, 7
      %p107 = por %p105, %p106
      %p108 = scmp.ne.s32.totalorder %s97, %s98
      %p109 = scmp.eq.s32.totalorder %s25, 0
      %p110 = por %p108, %p109
      %p111 = scmp.ne.s32.totalorder %s97, %s98
      %p112 = scmp.eq.s32.totalorder %s26, 7
      %p113 = por %p111, %p112
      %p115 = scmp.ne.s32.totalorder %s98, %s114
      %p116 = scmp.eq.s32.totalorder %s26, 0
      %p117 = por %p115, %p116
      %s118 = ssub.s32 %s28, %s35
      %p119 = scmp.eq.s32.totalorder %s118, 0
      %s121 = sadd.s32 %s120, 1
      %s122 = scalar_select %p119, %s120, %s121
      %p125 = pneg %p119
      %p126 = scmp.eq.s32.totalorder %s20, 7
      %p127 = por %p125, %p126
      %p128 = scmp.ne.s32.totalorder %s120, %s123
      %p129 = scmp.eq.s32.totalorder %s20, 0
      %p130 = por %p128, %p129
      %p131 = scmp.ne.s32.totalorder %s120, %s123
      %p132 = scmp.eq.s32.totalorder %s25, 7
      %p133 = por %p131, %p132
      %p134 = scmp.ne.s32.totalorder %s123, %s124
      %p135 = scmp.eq.s32.totalorder %s25, 0
      %p136 = por %p134, %p135
      %p137 = scmp.ne.s32.totalorder %s123, %s124
      %p138 = scmp.eq.s32.totalorder %s26, 7
      %p139 = por %p137, %p138
      %p141 = scmp.ne.s32.totalorder %s124, %s140
      %p142 = scmp.eq.s32.totalorder %s26, 0
      %p143 = por %p141, %p142
      %s144 = ssub.s32 %s28, %s35
      %p145 = scmp.eq.s32.totalorder %s144, 0
      %s147 = sadd.s32 %s146, 1
      %s148 = scalar_select %p145, %s146, %s147
      %p151 = pneg %p145
      %p152 = scmp.eq.s32.totalorder %s20, 7
      %p153 = por %p151, %p152
      %p154 = scmp.ne.s32.totalorder %s146, %s149
      %p155 = scmp.eq.s32.totalorder %s20, 0
      %p156 = por %p154, %p155
      %p157 = scmp.ne.s32.totalorder %s146, %s149
      %p158 = scmp.eq.s32.totalorder %s25, 7
      %p159 = por %p157, %p158
      %p160 = scmp.ne.s32.totalorder %s149, %s150
      %p161 = scmp.eq.s32.totalorder %s25, 0
      %p162 = por %p160, %p161
      %p163 = scmp.ne.s32.totalorder %s149, %s150
      %p164 = scmp.eq.s32.totalorder %s26, 7
      %p165 = por %p163, %p164
      %p167 = scmp.ne.s32.totalorder %s150, %s166
      %p168 = scmp.eq.s32.totalorder %s26, 0
      %p169 = por %p167, %p168
      %s170 = ssub.s32 %s28, %s35
      %p171 = scmp.eq.s32.totalorder %s170, 0
      %s173 = sadd.s32 %s172, 1
      %s174 = scalar_select %p171, %s172, %s173
      %p177 = pneg %p171
      %p178 = scmp.eq.s32.totalorder %s20, 7
      %p179 = por %p177, %p178
      %p180 = scmp.ne.s32.totalorder %s172, %s175
      %p181 = scmp.eq.s32.totalorder %s20, 0
      %p182 = por %p180, %p181
      %p183 = scmp.ne.s32.totalorder %s172, %s175
      %p184 = scmp.eq.s32.totalorder %s25, 7
      %p185 = por %p183, %p184
      %p186 = scmp.ne.s32.totalorder %s175, %s176
      %p187 = scmp.eq.s32.totalorder %s25, 0
      %p188 = por %p186, %p187
      %p189 = scmp.ne.s32.totalorder %s175, %s176
      %p190 = scmp.eq.s32.totalorder %s26, 7
      %p191 = por %p189, %p190
      %p193 = scmp.ne.s32.totalorder %s176, %s192
      %p194 = scmp.eq.s32.totalorder %s26, 0
      %p195 = por %p193, %p194
      %s196 = ssub.s32 %s28, %s35
      %p197 = scmp.eq.s32.totalorder %s196, 0
      %s199 = sadd.s32 %s198, 1
      %s200 = scalar_select %p197, %s198, %s199
      %p203 = pneg %p197
      %p204 = scmp.eq.s32.totalorder %s20, 7
      %p205 = por %p203, %p204
      %p206 = scmp.ne.s32.totalorder %s198, %s201
      %p207 = scmp.eq.s32.totalorder %s20, 0
      %p208 = por %p206, %p207
      %p209 = scmp.ne.s32.totalorder %s198, %s201
      %p210 = scmp.eq.s32.totalorder %s25, 7
      %p211 = por %p209, %p210
      %p212 = scmp.ne.s32.totalorder %s201, %s202
      %p213 = scmp.eq.s32.totalorder %s25, 0
      %p214 = por %p212, %p213
      %p215 = scmp.ne.s32.totalorder %s201, %s202
      %p216 = scmp.eq.s32.totalorder %s26, 7
      %p217 = por %p215, %p216
      %p219 = scmp.ne.s32.totalorder %s202, %s218
      %p220 = scmp.eq.s32.totalorder %s26, 0
      %p221 = por %p219, %p220
      %s222 = ssub.s32 %s28, %s35
      %p223 = scmp.eq.s32.totalorder %s222, 0
      %s225 = sadd.s32 %s224, 1
      %s226 = scalar_select %p223, %s224, %s225
      %p229 = pneg %p223
      %p230 = scmp.eq.s32.totalorder %s20, 7
      %p231 = por %p229, %p230
      %p232 = scmp.ne.s32.totalorder %s224, %s227
      %p233 = scmp.eq.s32.totalorder %s20, 0
      %p234 = por %p232, %p233
      %p235 = scmp.ne.s32.totalorder %s224, %s227
      %p236 = scmp.eq.s32.totalorder %s25, 7
      %p237 = por %p235, %p236
      %p238 = scmp.ne.s32.totalorder %s227, %s228
      %p239 = scmp.eq.s32.totalorder %s25, 0
      %p240 = por %p238, %p239
      %p241 = scmp.ne.s32.totalorder %s227, %s228
      %p242 = scmp.eq.s32.totalorder %s26, 7
      %p243 = por %p241, %p242
      %p245 = scmp.ne.s32.totalorder %s228, %s244
      %p246 = scmp.eq.s32.totalorder %s26, 0
      %p247 = por %p245, %p246
      %s248 = ssub.s32 %s28, %s35
      %p249 = scmp.eq.s32.totalorder %s248, 0
      %s251 = sadd.s32 %s250, 1
      %s252 = scalar_select %p249, %s250, %s251
      %p255 = pneg %p249
      %p256 = scmp.eq.s32.totalorder %s20, 7
      %p257 = por %p255, %p256
      %p258 = scmp.ne.s32.totalorder %s250, %s253
      %p259 = scmp.eq.s32.totalorder %s20, 0
      %p260 = por %p258, %p259
      %p261 = scmp.ne.s32.totalorder %s250, %s253
      %p262 = scmp.eq.s32.totalorder %s25, 7
      %p263 = por %p261, %p262
      %p264 = scmp.ne.s32.totalorder %s253, %s254
      %p265 = scmp.eq.s32.totalorder %s25, 0
      %p266 = por %p264, %p265
      %p267 = scmp.ne.s32.totalorder %s253, %s254
      %p268 = scmp.eq.s32.totalorder %s26, 7
      %p269 = por %p267, %p268
      %p271 = scmp.ne.s32.totalorder %s254, %s270
      %p272 = scmp.eq.s32.totalorder %s26, 0
      %p273 = por %p271, %p272
      %s274 = ssub.s32 %s28, %s35
      %p275 = scmp.eq.s32.totalorder %s274, 0
      %s277 = sadd.s32 %s276, 1
      %s278 = scalar_select %p275, %s276, %s277
      %p281 = pneg %p275
      %p282 = scmp.eq.s32.totalorder %s20, 7
      %p283 = por %p281, %p282
      %p284 = scmp.ne.s32.totalorder %s276, %s279
      %p285 = scmp.eq.s32.totalorder %s20, 0
      %p286 = por %p284, %p285
      %p287 = scmp.ne.s32.totalorder %s276, %s279
      %p288 = scmp.eq.s32.totalorder %s25, 7
      %p289 = por %p287, %p288
      %p290 = scmp.ne.s32.totalorder %s279, %s280
      %p291 = scmp.eq.s32.totalorder %s25, 0
      %p292 = por %p290, %p291
      %p293 = scmp.ne.s32.totalorder %s279, %s280
      %p294 = scmp.eq.s32.totalorder %s26, 7
      %p295 = por %p293, %p294
      %p297 = scmp.ne.s32.totalorder %s280, %s296
      %p298 = scmp.eq.s32.totalorder %s26, 0
      %p299 = por %p297, %p298
      %s301 = sadd.s32 %s300, 1
      %p304 = scmp.eq.s32.totalorder %s20, 7
      %p305 = scmp.ne.s32.totalorder %s300, %s302
      %p306 = scmp.eq.s32.totalorder %s20, 0
      %p307 = por %p305, %p306
      %p308 = scmp.ne.s32.totalorder %s300, %s302
      %p309 = scmp.eq.s32.totalorder %s25, 7
      %p310 = por %p308, %p309
      %p311 = scmp.ne.s32.totalorder %s302, %s303
      %p312 = scmp.eq.s32.totalorder %s25, 0
      %p313 = por %p311, %p312
      %p314 = scmp.ne.s32.totalorder %s302, %s303
      %p315 = scmp.eq.s32.totalorder %s26, 7
      %p316 = por %p314, %p315
      %p318 = scmp.ne.s32.totalorder %s303, %s317
      %p319 = scmp.eq.s32.totalorder %s26, 0
      %p320 = por %p318, %p319
      %s321 = ssub.s32 %s27, %s39
      %p322 = scmp.eq.s32.totalorder %s321, 0
      %s324 = sadd.s32 %s323, 1
      %s325 = scalar_select %p322, %s323, %s324
      %p328 = pneg %p322
      %p329 = scmp.eq.s32.totalorder %s20, 7
      %p330 = por %p328, %p329
      %p331 = scmp.ne.s32.totalorder %s323, %s326
      %p332 = scmp.eq.s32.totalorder %s20, 0
      %p333 = por %p331, %p332
      %p334 = scmp.ne.s32.totalorder %s323, %s326
      %p335 = scmp.eq.s32.totalorder %s25, 7
      %p336 = por %p334, %p335
      %p337 = scmp.ne.s32.totalorder %s326, %s327
      %p338 = scmp.eq.s32.totalorder %s25, 0
      %p339 = por %p337, %p338
      %p340 = scmp.ne.s32.totalorder %s326, %s327
      %p341 = scmp.eq.s32.totalorder %s26, 7
      %p342 = por %p340, %p341
      %p344 = scmp.ne.s32.totalorder %s327, %s343
      %p345 = scmp.eq.s32.totalorder %s26, 0
      %p346 = por %p344, %p345
      %p347 = scmp.le.s32.totalorder 1, %s20
      %p348 = scmp.lt.s32.totalorder %s20, 9
      %p349 = pnand %p347, %p348
      %p350 = pneg %p349
      // Predicated region
      $region9: #{tpu_custom_call.1} parent=5 // pred_check
        _
      $region10: #{tpu_custom_call.1} parent=5 // pred_check_branch
        %352 = sbr.rel (%p349) target = $region12
      $region11: #{tpu_custom_call.1} parent=5 // pred_region
        %s353 = ssub.s32 %s20, 1
        // Predicated region
        $region13: #{tpu_custom_call.1} parent=11 // pred_check
          %p354 = pneg %p313
        $region14: #{tpu_custom_call.1} parent=11 // pred_check_branch
          %356 = sbr.rel (%p354) target = $region16
        $region15: #{tpu_custom_call.1} parent=11 // pred_region
          _
        $region16: #{tpu_custom_call.1} parent=11 // pred_fallthru
          _
      $region12: #{tpu_custom_call.1} parent=5 // pred_fallthru
        _
      %p357 = scmp.lt.s32.totalorder %s20, 8
      // Predicated region
      $region17: #{tpu_custom_call.1} parent=5 // pred_check
        %p358 = pneg %p357
      $region18: #{tpu_custom_call.1} parent=5 // pred_check_branch
        %360 = sbr.rel (%p358) target = $region20
      $region19: #{tpu_custom_call.1} parent=5 // pred_region
        // Predicated region
        $region21: #{tpu_custom_call.1} parent=19 // pred_check
          %p361 = pneg %p52
        $region22: #{tpu_custom_call.1} parent=19 // pred_check_branch
          %363 = sbr.rel (%p361) target = $region24
        $region23: #{tpu_custom_call.1} parent=19 // pred_region
          %p364 = scmp.lt.s32.totalorder %s27, 1
          %s365 = scalar_select %p364, %s27, 1
          %s366 = smul.addr %s365, 8
          %s367 = scalar_lea.vmem %s0, %s366
        $region24: #{tpu_custom_call.1} parent=19 // pred_fallthru
          _
        // Predicated region
        $region25: #{tpu_custom_call.1} parent=19 // pred_check
          %p368 = pneg %p78
        $region26: #{tpu_custom_call.1} parent=19 // pred_check_branch
          %370 = sbr.rel (%p368) target = $region28
        $region27: #{tpu_custom_call.1} parent=19 // pred_region
          %p371 = scmp.lt.s32.totalorder %s27, 1
          %s372 = scalar_select %p371, %s27, 1
          %s373 = smul.addr %s372, 8
          %s374 = scalar_lea.vmem %s1, %s373
        $region28: #{tpu_custom_call.1} parent=19 // pred_fallthru
          _
        // Predicated region
        $region29: #{tpu_custom_call.1} parent=19 // pred_check
          %p375 = pneg %p104
        $region30: #{tpu_custom_call.1} parent=19 // pred_check_branch
          %377 = sbr.rel (%p375) target = $region32
        $region31: #{tpu_custom_call.1} parent=19 // pred_region
          %p378 = scmp.lt.s32.totalorder %s27, 1
          %s379 = scalar_select %p378, %s27, 1
          %s380 = smul.addr %s379, 8
          %s381 = scalar_lea.vmem %s2, %s380
        $region32: #{tpu_custom_call.1} parent=19 // pred_fallthru
          _
        // Predicated region
        $region33: #{tpu_custom_call.1} parent=19 // pred_check
          %p382 = pneg %p130
        $region34: #{tpu_custom_call.1} parent=19 // pred_check_branch
          %384 = sbr.rel (%p382) target = $region36
        $region35: #{tpu_custom_call.1} parent=19 // pred_region
          %p385 = scmp.lt.s32.totalorder %s28, 3
          %s386 = scalar_select %p385, %s28, 3
          %s387 = smul.addr %s386, 4
          %s388 = smul.addr %s387, 4
          %s389 = scalar_lea.vmem %s3, %s388
        $region36: #{tpu_custom_call.1} parent=19 // pred_fallthru
          _
        // Predicated region
        $region37: #{tpu_custom_call.1} parent=19 // pred_check
          %p390 = pneg %p156
        $region38: #{tpu_custom_call.1} parent=19 // pred_check_branch
          %392 = sbr.rel (%p390) target = $region40
        $region39: #{tpu_custom_call.1} parent=19 // pred_region
          %p393 = scmp.lt.s32.totalorder %s28, 3
          %s394 = scalar_select %p393, %s28, 3
          %s395 = scalar_lea.vmem %s4, %s394
        $region40: #{tpu_custom_call.1} parent=19 // pred_fallthru
          _
        // Predicated region
        $region41: #{tpu_custom_call.1} parent=19 // pred_check
          %p396 = pneg %p182
        $region42: #{tpu_custom_call.1} parent=19 // pred_check_branch
          %398 = sbr.rel (%p396) target = $region44
        $region43: #{tpu_custom_call.1} parent=19 // pred_region
          %p399 = scmp.lt.s32.totalorder %s28, 3
          %s400 = scalar_select %p399, %s28, 3
          %s401 = smul.addr %s400, 4
          %s402 = smul.addr %s401, 4
          %s403 = scalar_lea.vmem %s5, %s402
        $region44: #{tpu_custom_call.1} parent=19 // pred_fallthru
          _
        // Predicated region
        $region45: #{tpu_custom_call.1} parent=19 // pred_check
          %p404 = pneg %p208
        $region46: #{tpu_custom_call.1} parent=19 // pred_check_branch
          %406 = sbr.rel (%p404) target = $region48
        $region47: #{tpu_custom_call.1} parent=19 // pred_region
          %p407 = scmp.lt.s32.totalorder %s28, 3
          %s408 = scalar_select %p407, %s28, 3
          %s409 = scalar_lea.vmem %s6, %s408
        $region48: #{tpu_custom_call.1} parent=19 // pred_fallthru
          _
        // Predicated region
        $region49: #{tpu_custom_call.1} parent=19 // pred_check
          %p410 = pneg %p234
        $region50: #{tpu_custom_call.1} parent=19 // pred_check_branch
          %412 = sbr.rel (%p410) target = $region52
        $region51: #{tpu_custom_call.1} parent=19 // pred_region
          %p413 = scmp.lt.s32.totalorder %s28, 3
          %s414 = scalar_select %p413, %s28, 3
          %s415 = smul.addr %s414, 4
          %s416 = smul.addr %s415, 4
          %s417 = scalar_lea.vmem %s7, %s416
        $region52: #{tpu_custom_call.1} parent=19 // pred_fallthru
          _
        // Predicated region
        $region53: #{tpu_custom_call.1} parent=19 // pred_check
          %p418 = pneg %p260
        $region54: #{tpu_custom_call.1} parent=19 // pred_check_branch
          %420 = sbr.rel (%p418) target = $region56
        $region55: #{tpu_custom_call.1} parent=19 // pred_region
          %p421 = scmp.lt.s32.totalorder %s28, 3
          %s422 = scalar_select %p421, %s28, 3
          %s423 = scalar_lea.vmem %s8, %s422
        $region56: #{tpu_custom_call.1} parent=19 // pred_fallthru
          _
        // Predicated region
        $region57: #{tpu_custom_call.1} parent=19 // pred_check
          %p424 = pneg %p286
        $region58: #{tpu_custom_call.1} parent=19 // pred_check_branch
          %426 = sbr.rel (%p424) target = $region60
        $region59: #{tpu_custom_call.1} parent=19 // pred_region
          %p427 = scmp.lt.s32.totalorder %s28, 3
          %s428 = scalar_select %p427, %s28, 3
          %s429 = smul.addr %s428, 4
          %s430 = scalar_lea.vmem %s9, %s429
        $region60: #{tpu_custom_call.1} parent=19 // pred_fallthru
          _
      $region20: #{tpu_custom_call.1} parent=5 // pred_fallthru
        _
      %p431 = scmp.le.s32.totalorder 1, %s20
      %p432 = scmp.lt.s32.totalorder %s20, 9
      %p433 = pnand %p431, %p432
      %p434 = pneg %p433
      // Predicated region
      $region61: #{tpu_custom_call.1} parent=5 // pred_check
        _
      $region62: #{tpu_custom_call.1} parent=5 // pred_check_branch
        %436 = sbr.rel (%p433) target = $region64
      $region63: #{tpu_custom_call.1} parent=5 // pred_region
        %s437 = ssub.s32 %s20, 1
        %p438 = scmp.lt.s32.totalorder %s29, 1
        %s439 = scalar_select %p438, %s29, 1
        %s440 = smul.addr %s439, 8
        %s441 = scalar_lea.vmem %s0, %s440
        %p442 = pneg %p58
        %p443 = pneg %p55
        %p444 = scmp.lt.s32.totalorder %s29, 1
        %s445 = scalar_select %p444, %s29, 1
        %s446 = smul.addr %s445, 8
        %s447 = scalar_lea.vmem %s1, %s446
        %p448 = pneg %p84
        %p449 = pneg %p81
        %p450 = scmp.lt.s32.totalorder %s29, 1
        %s451 = scalar_select %p450, %s29, 1
        %s452 = smul.addr %s451, 8
        %s453 = scalar_lea.vmem %s2, %s452
        %p454 = pneg %p110
        %p455 = pneg %p107
        %p456 = scmp.lt.s32.totalorder %s30, 3
        %s457 = scalar_select %p456, %s30, 3
        %s458 = smul.addr %s457, 4
        %s459 = smul.addr %s458, 4
        %s460 = scalar_lea.vmem %s3, %s459
        %p461 = pneg %p136
        %p462 = pneg %p133
        %p463 = scmp.lt.s32.totalorder %s30, 3
        %s464 = scalar_select %p463, %s30, 3
        %s465 = scalar_lea.vmem %s4, %s464
        %p466 = pneg %p162
        %p467 = pneg %p159
        %p468 = scmp.lt.s32.totalorder %s30, 3
        %s469 = scalar_select %p468, %s30, 3
        %s470 = smul.addr %s469, 4
        %s471 = smul.addr %s470, 4
        %s472 = scalar_lea.vmem %s5, %s471
        %p473 = pneg %p188
        %p474 = pneg %p185
        %p475 = scmp.lt.s32.totalorder %s30, 3
        %s476 = scalar_select %p475, %s30, 3
        %s477 = scalar_lea.vmem %s6, %s476
        %p478 = pneg %p214
        %p479 = pneg %p211
        %p480 = scmp.lt.s32.totalorder %s30, 3
        %s481 = scalar_select %p480, %s30, 3
        %s482 = smul.addr %s481, 4
        %s483 = smul.addr %s482, 4
        %s484 = scalar_lea.vmem %s7, %s483
        %p485 = pneg %p240
        %p486 = pneg %p237
        %p487 = scmp.lt.s32.totalorder %s30, 3
        %s488 = scalar_select %p487, %s30, 3
        %s489 = scalar_lea.vmem %s8, %s488
        %p490 = pneg %p266
        %p491 = pneg %p263
        %p492 = scmp.lt.s32.totalorder %s30, 3
        %s493 = scalar_select %p492, %s30, 3
        %s494 = smul.addr %s493, 4
        %s495 = scalar_lea.vmem %s9, %s494
        %p496 = pneg %p292
        %p497 = pneg %p289
        %p498 = pneg %p313
        %p499 = pneg %p310
        %p500 = pneg %p339
        %p501 = pneg %p336
        %s502 = sand.u32 %s326, 1
        %s503 = scalar_lea.sflag [#allocation4], %s502
        %s504 = sand.u32 %s326, 1
        %s505 = smul.addr %s504, 8
        %s506 = scalar_lea.vmem [#allocation3], %s505
        %p507 = scmp.lt.s32.totalorder %s29, 1
        %s508 = scalar_select %p507, %s29, 1
        %s509 = smul.addr %s508, 8
        %s510 = scalar_lea.vmem %s0, %s509
        %p511 = scmp.lt.s32.totalorder %s29, 1
        %s512 = scalar_select %p511, %s29, 1
        %s513 = smul.addr %s512, 8
        %s514 = scalar_lea.vmem %s1, %s513
        %p515 = scmp.lt.s32.totalorder %s29, 1
        %s516 = scalar_select %p515, %s29, 1
        %s517 = smul.addr %s516, 8
        %s518 = scalar_lea.vmem %s2, %s517
        %p519 = scmp.lt.s32.totalorder %s30, 3
        %s520 = scalar_select %p519, %s30, 3
        %s521 = smul.addr %s520, 4
        %s522 = smul.addr %s521, 4
        %s523 = scalar_lea.vmem %s3, %s522
        %p524 = scmp.lt.s32.totalorder %s30, 3
        %s525 = scalar_select %p524, %s30, 3
        %s526 = scalar_lea.vmem %s4, %s525
        %p527 = scmp.lt.s32.totalorder %s30, 3
        %s528 = scalar_select %p527, %s30, 3
        %s529 = smul.addr %s528, 4
        %s530 = smul.addr %s529, 4
        %s531 = scalar_lea.vmem %s5, %s530
        %p532 = scmp.lt.s32.totalorder %s30, 3
        %s533 = scalar_select %p532, %s30, 3
        %s534 = scalar_lea.vmem %s6, %s533
        %p535 = scmp.lt.s32.totalorder %s30, 3
        %s536 = scalar_select %p535, %s30, 3
        %s537 = smul.addr %s536, 4
        %s538 = smul.addr %s537, 4
        %s539 = scalar_lea.vmem %s7, %s538
        %p540 = scmp.lt.s32.totalorder %s30, 3
        %s541 = scalar_select %p540, %s30, 3
        %s542 = scalar_lea.vmem %s8, %s541
        %p543 = scmp.lt.s32.totalorder %s30, 3
        %s544 = scalar_select %p543, %s30, 3
        %s545 = smul.addr %s544, 4
        %s546 = scalar_lea.vmem %s9, %s545
        %v548 = vld [vmem:[%s510] sm:$0xff]
        %v549 = vpack.c.bf16 %v548, %v548
        %v550 = vld [vmem:[%s514] sm:$0xff]
        %v551 = vpack.c.bf16 %v550, %v550
        %v552 = vld [vmem:[%s518] sm:$0xff]
        %v553 = vpack.c.bf16 %v552, %v552
        %v554 = vld [vmem:[%s523] sm:$0xf]
        %v555 = vld [vmem:[%s523 + $0x4] sm:$0xf]
        %v556 = vld [vmem:[%s523 + $0x8] sm:$0xf]
        %v557 = vld [vmem:[%s523 + $0xc] sm:$0xf]
        %v558 = vld [vmem:[%s526] sm:$0x1]
        %v560 = vperm.slane %v558, 0
        %v566 = vunpack.c.l.b16 %v554
        %v567 = vunpack.c.l.b16 %v555
        %v568 = vunpack.c.l.b16 %v556
        %v569 = vunpack.c.l.b16 %v557
        %v570 = vpack.c.b16 %v567, %v566
        %v571 = vpack.c.b16 %v569, %v568
        %vm574 = vcmask 261120
        %v576 = vsel %vm574, %v549, 0
        %578 = vmatpush.bf16.msra.mxu0 0
        %579 = vmatpush.bf16.msra.mxu0 0
        %580 = vmatpush.bf16.msra.mxu0 0
        %581 = vmatpush.bf16.msra.mxu0 0
        %582 = vmatpush.bf16.msra.mxu0 0
        %583 = vmatpush.bf16.msra.mxu0 0
        %584 = vmatpush.bf16.msra.mxu0 %v571
        %585 = vmatpush.bf16.msra.mxu0 %v570
        %586 = vmatmul.bf16.gmra.mxu0 %v576
        %v587 = vpop.f32.mrf.mxu0
        %v588 = vadd.f32 %v560, %v587
        %v589 = vpop.f32.mrf.mxu0
        %590 = vdwg.mxu0
        %v591 = vld [vmem:[%s531] sm:$0xf]
        %v592 = vld [vmem:[%s531 + $0x4] sm:$0xf]
        %v593 = vld [vmem:[%s531 + $0x8] sm:$0xf]
        %v594 = vld [vmem:[%s531 + $0xc] sm:$0xf]
        %v595 = vld [vmem:[%s534] sm:$0x1]
        %v597 = vperm.slane %v595, 0
        %v603 = vunpack.c.l.b16 %v591
        %v604 = vunpack.c.l.b16 %v592
        %v605 = vunpack.c.l.b16 %v593
        %v606 = vunpack.c.l.b16 %v594
        %v607 = vpack.c.b16 %v604, %v603
        %v608 = vpack.c.b16 %v606, %v605
        %v612 = vsel %vm574, %v551, 0
        %614 = vmatpush.bf16.msra.mxu0 0
        %615 = vmatpush.bf16.msra.mxu0 0
        %616 = vmatpush.bf16.msra.mxu0 0
        %617 = vmatpush.bf16.msra.mxu0 0
        %618 = vmatpush.bf16.msra.mxu0 0
        %619 = vmatpush.bf16.msra.mxu0 0
        %620 = vmatpush.bf16.msra.mxu0 %v608
        %621 = vmatpush.bf16.msra.mxu0 %v607
        %622 = vmatmul.bf16.gmra.mxu0 %v612
        %v623 = vpop.f32.mrf.mxu0
        %v624 = vadd.f32 %v597, %v623
        %v625 = vpop.f32.mrf.mxu0
        %626 = vdwg.mxu0
        %v627 = vld [vmem:[%s539] sm:$0xf]
        %v628 = vld [vmem:[%s539 + $0x4] sm:$0xf]
        %v629 = vld [vmem:[%s539 + $0x8] sm:$0xf]
        %v630 = vld [vmem:[%s539 + $0xc] sm:$0xf]
        %v631 = vld [vmem:[%s542] sm:$0x1]
        %v633 = vperm.slane %v631, 0
        %v639 = vunpack.c.l.b16 %v627
        %v640 = vunpack.c.l.b16 %v628
        %v641 = vunpack.c.l.b16 %v629
        %v642 = vunpack.c.l.b16 %v630
        %v643 = vpack.c.b16 %v640, %v639
        %v644 = vpack.c.b16 %v642, %v641
        %v648 = vsel %vm574, %v553, 0
        %650 = vmatpush.bf16.msra.mxu0 0
        %651 = vmatpush.bf16.msra.mxu0 0
        %652 = vmatpush.bf16.msra.mxu0 0
        %653 = vmatpush.bf16.msra.mxu0 0
        %654 = vmatpush.bf16.msra.mxu0 0
        %655 = vmatpush.bf16.msra.mxu0 0
        %656 = vmatpush.bf16.msra.mxu0 %v644
        %657 = vmatpush.bf16.msra.mxu0 %v643
        %658 = vmatmul.bf16.gmra.mxu0 %v648
        %v659 = vpop.f32.mrf.mxu0
        %v660 = vadd.f32 %v633, %v659
        %v661 = vpop.f32.mrf.mxu0
        %662 = vdwg.mxu0
        %v663 = vpack.c.bf16 %v588, %v588
        %v664 = vpack.c.bf16 %v624, %v624
        %vm665 = vcmask 64512
        %v667 = vsel %vm665, %v663, 0
        %v670 = vsel %vm665, %v664, 0
        %672 = vmatpush.bf16.xpose.msra.mxu0 0
        %673 = vmatpush.bf16.xpose.msra.mxu0 0
        %674 = vmatpush.bf16.xpose.msra.mxu0 0
        %675 = vmatpush.bf16.xpose.msra.mxu0 0
        %676 = vmatpush.bf16.xpose.msra.mxu0 0
        %677 = vmatpush.bf16.xpose.msra.mxu0 0
        %678 = vmatpush.bf16.xpose.msra.mxu0 0
        %679 = vmatpush.bf16.xpose.msra.mxu0 %v670
        %680 = vmatmul.bf16.gmra.mxu0 %v667
        %v681 = vpop.f32.mrf.mxu0
        %v682 = vadd.f32 0.0, %v681
        %v683 = vpop.f32.mrf.mxu0
        %684 = vdwg.mxu0
        %v685 = vsel %vm665, %v682, -inf
        %686 = vmax.xlane.f32.xlu0 %v685
        %v687 = vpop.xlane.xlu0 %686
        %v688 = vsub.f32 %v682, %v687
        %v689 = vmul.f32 %v688, 1.442695
        %v690 = vpow.pop %v689
        %v691 = vsel %vm665, %v690, 0.0
        %692 = vadd.xlane.f32.xlu0 %v691
        %v693 = vpop.xlane.xlu0 %692
        %v694 = vpack.c.bf16 %v690, %v690
        %v695 = vpack.c.bf16 %v660, %v660
        %v697 = vsel %vm665, %v694, 0
        %vm699 = vcmask 1043456
        %v701 = vsel %vm699, %v695, 0
        %703 = vmatpush.bf16.msra.mxu0 0
        %704 = vmatpush.bf16.msra.mxu0 0
        %705 = vmatpush.bf16.msra.mxu0 0
        %706 = vmatpush.bf16.msra.mxu0 0
        %707 = vmatpush.bf16.msra.mxu0 0
        %708 = vmatpush.bf16.msra.mxu0 0
        %709 = vmatpush.bf16.msra.mxu0 0
        %710 = vmatpush.bf16.msra.mxu0 %v701
        %711 = vmatmul.bf16.gmra.mxu0 %v697
        %v712 = vpop.f32.mrf.mxu0
        %v713 = vadd.f32 0.0, %v712
        %v714 = vpop.f32.mrf.mxu0
        %715 = vdwg.mxu0
        %v716 = vrcp.pop %v693
        %v717 = vmul.f32 %v713, %v716
        %v718 = vpack.c.bf16 %v717, %v717
        %v719 = vld [vmem:[%s546] sm:$0xf]
        %v721 = vsel %vm665, %v718, 0
        %v724 = vsel %vm699, %v719, 0
        %726 = vmatpush.bf16.msra.mxu0 0
        %727 = vmatpush.bf16.msra.mxu0 0
        %728 = vmatpush.bf16.msra.mxu0 0
        %729 = vmatpush.bf16.msra.mxu0 0
        %730 = vmatpush.bf16.msra.mxu0 0
        %731 = vmatpush.bf16.msra.mxu0 0
        %732 = vmatpush.bf16.msra.mxu0 0
        %733 = vmatpush.bf16.msra.mxu0 %v724
        %734 = vmatmul.bf16.gmra.mxu0 %v721
        %v735 = vpop.f32.mrf.mxu0
        %v736 = vadd.f32 0.0, %v735
        %v737 = vpop.f32.mrf.mxu0
        %738 = vdwg.mxu0
        %p739 = scmp.eq.s32.totalorder %s30, 0
        // Predicated region
        $region65: #{tpu_custom_call.1} parent=63 // pred_check
          %p740 = pneg %p739
        $region66: #{tpu_custom_call.1} parent=63 // pred_check_branch
          %742 = sbr.rel (%p740) target = $region68
        $region67: #{tpu_custom_call.1} parent=63 // pred_region
          %v743 = vld [vmem:[%s10] sm:$0x1]
          %v745 = vperm.slane %v743, 0
          %v747 = vadd.f32 %v736, %v745
          %748 = vst.msk [vmem:[#allocation2] sm:$0xff] %vm574, %v747
        $region68: #{tpu_custom_call.1} parent=63 // pred_fallthru
          _
        %p749 = scmp.gt.s32.totalorder %s30, 0
        // Predicated region
        $region69: #{tpu_custom_call.1} parent=63 // pred_check
          %p750 = pneg %p749
        $region70: #{tpu_custom_call.1} parent=63 // pred_check_branch
          %752 = sbr.rel (%p750) target = $region72
        $region71: #{tpu_custom_call.1} parent=63 // pred_region
          %v753 = vld [vmem:[#allocation2] sm:$0xff]
          %v754 = vadd.f32 %v753, %v736
          %755 = vst.msk [vmem:[#allocation2] sm:$0xff] %vm574, %v754
        $region72: #{tpu_custom_call.1} parent=63 // pred_fallthru
          _
        %p756 = scmp.eq.s32.totalorder %s30, 3
        // Predicated region
        $region73: #{tpu_custom_call.1} parent=63 // pred_check
          %p757 = pneg %p756
        $region74: #{tpu_custom_call.1} parent=63 // pred_check_branch
          %759 = sbr.rel (%p757) target = $region76
        $region75: #{tpu_custom_call.1} parent=63 // pred_region
          %v760 = vld [vmem:[#allocation2] sm:$0xff]
          %761 = vst.msk [vmem:[%s506] sm:$0xff] %vm574, %v760
        $region76: #{tpu_custom_call.1} parent=63 // pred_fallthru
          _
        %s762 = sand.u32 %s326, 1
        %s763 = scalar_lea.sflag [#allocation4], %s762
        %s764 = sand.u32 %s326, 1
        %s765 = smul.addr %s764, 8
        %s766 = scalar_lea.vmem [#allocation3], %s765
        // Predicated region
        $region77: #{tpu_custom_call.1} parent=63 // pred_check
          %p767 = pneg %p336
        $region78: #{tpu_custom_call.1} parent=63 // pred_check_branch
          %769 = sbr.rel (%p767) target = $region80
        $region79: #{tpu_custom_call.1} parent=63 // pred_region
          %771 = vsyncadd %s763, 0
          %s772 = smul.addr %s29, 8
          %s773 = scalar_lea.hbm %s11, %s772
          %s775 = sshll.u32 %s766, 4
          %s776 = int_to_ptr.vmem [resolvable:$true] %s775
          %s777 = sshll.u32 %s773, 4
          %s778 = int_to_ptr.hbm [resolvable:$true] %s777
          %780 = dma.vmem_to_hbm [thread:$0]  %s776, 128, %s778, %s763
        $region80: #{tpu_custom_call.1} parent=63 // pred_fallthru
          _
      $region64: #{tpu_custom_call.1} parent=5 // pred_fallthru
        _
      %p781 = scmp.le.s32.totalorder 2, %s20
      // Predicated region
      $region81: #{tpu_custom_call.1} parent=5 // pred_check
        %p782 = pneg %p781
      $region82: #{tpu_custom_call.1} parent=5 // pred_check_branch
        %784 = sbr.rel (%p782) target = $region84
      $region83: #{tpu_custom_call.1} parent=5 // pred_region
        %s785 = ssub.s32 %s20, 2
        // Predicated region
        $region85: #{tpu_custom_call.1} parent=83 // pred_check
          %p786 = pneg %p342
        $region86: #{tpu_custom_call.1} parent=83 // pred_check_branch
          %788 = sbr.rel (%p786) target = $region88
        $region87: #{tpu_custom_call.1} parent=83 // pred_region
          %s789 = sand.u32 %s327, 1
          %s790 = scalar_lea.sflag [#allocation4], %s789
          %s791 = sand.u32 %s327, 1
          %s792 = smul.addr %s791, 8
          %s793 = scalar_lea.vmem [#allocation3], %s792
          %795 = dma.done %s790, 128
        $region88: #{tpu_custom_call.1} parent=83 // pred_fallthru
          _
      $region84: #{tpu_custom_call.1} parent=5 // pred_fallthru
        _
    $region6: #{tpu_custom_call.1} parent=1 // loop_footer
      %s24 = sadd.s32 1, %s20
    $region7: #{tpu_custom_call.1} parent=1 // loop_footer_branch
      %19 = sbr.rel target = $region3
    $region8: #{tpu_custom_call.1} parent=1 // loop_exit
      _
    %796 = vsyncpa [#allocation4], 1
    %s797 = scalar_lea.sflag [#allocation4], 1
    %798 = vsyncpa %s797, 1

</llo_original>
